<compile_context>
chip_gen: v7x
topology: tpu7x:2x2x1
jax: 0.10.0
libtpu: 0.0.40
codegen_flags: <defaults>
</compile_context>

<pallas_src>
import functools

import jax
import jax.numpy as jnp
from jax.experimental import pallas as pl
from jax.experimental.pallas import tpu as pltpu


def _sentiment_attention_kernel(scal_ref, s_ref, hs_ref, wmask_ref, blin_ref,
                                gc1_ref, gc0_ref, out_ref):
    """One (TN, Hf) row tile of the fused SentimentAttentionLayer forward."""
    a = scal_ref[0]
    b = scal_ref[1]

    # Expand per-row sentiment (TN, fold) onto the lane axis while applying the
    # Linear(1->H) weight.  wmask[f] is w_lin on lanes [f*H, (f+1)*H) and 0
    # elsewhere, so x[:, f*H+h] == s[:, f]*w_lin[h] + b_lin[h] exactly (the
    # zero terms add exactly 0).  `fold` is a small static int -> unrolled
    # broadcast-MACs; avoids streaming a full-size (N, H) sentiment array.
    s = s_ref[...]                                    # (TN, fold) f32
    fold = s.shape[1]
    x = s[:, 0:1] * wmask_ref[0:1, :]                 # (TN, Hf)
    for f in range(1, fold):
        x = x + s[:, f:f + 1] * wmask_ref[f:f + 1, :]
    x = x + blin_ref[...]

    x3 = x * x * x                                    # == sign(x) * |x|^3
    raw = jnp.exp(a * jnp.abs(x - x3) + b * jnp.abs(x + x3))   # EUP
    # gc1 = gate*scale/(rmax-rmin), gc0 = -rmin*gc1 : min-max norm + gate fused.
    mod = (gc1_ref[...] * raw + gc0_ref[...]) * jnp.tanh(x)    # tanh on EUP
    out_ref[...] = (hs_ref[...].astype(jnp.float32) * mod).astype(out_ref.dtype)


@functools.partial(jax.jit, static_argnames=("block_rows",))
def sentiment_attention_layer(hidden_states, sentiment_scores, params,
                              *, block_rows=2048):
    """hidden_states: (B, S, H) (any float dtype); sentiment_scores: (B, S)."""
    f32 = jnp.float32
    B, S, H = hidden_states.shape
    N = B * S
    out_dtype = hidden_states.dtype
    itemsize = jnp.dtype(out_dtype).itemsize

    s1d = sentiment_scores.reshape(N).astype(f32)
    w_lin = params["w_lin"].reshape(H).astype(f32)    # Linear(1, H).weight[:, 0]
    b_lin = params["b_lin"].reshape(H).astype(f32)    # Linear(1, H).bias
    gate = params["weight"].reshape(H).astype(f32)    # self.weight
    a = jnp.asarray(params["a"], f32).reshape(())
    b = jnp.asarray(params["b"], f32).reshape(())
    scale = jnp.asarray(params["scale"], f32).reshape(())

    # ---- Pass 1 (cheap, exact, fuses into a single reduce fusion; never
    # touches hidden_states): global min/max of the exponent.  exp is
    # monotone, so min/max commute with it — no transcendentals over (N, H).
    x_s = s1d[:, None] * w_lin[None, :] + b_lin[None, :]
    x3_s = x_s * x_s * x_s
    g = a * jnp.abs(x_s - x3_s) + b * jnp.abs(x_s + x3_s)
    rmin = jnp.exp(jnp.min(g))
    rmax = jnp.exp(jnp.max(g))
    c1 = scale / (rmax - rmin)      # rmax == rmin divides by 0, like PyTorch ref
    c0 = -rmin * c1

    # ---- Lane-dense folding of consecutive rows for small hidden sizes.
    fold = 128 // H if (H < 128 and 128 % H == 0 and N % (128 // H) == 0) else 1
    Hf = H * fold
    nf = N // fold

    hs_k = hidden_states.reshape(nf, Hf)              # free reshape, native dtype
    s_k = s1d.reshape(nf, fold)                       # tiny f32 sentiment stream

    # Resident per-feature vectors (tiny).
    wmask = (jnp.eye(fold, dtype=f32)[:, :, None] * w_lin[None, None, :]
             ).reshape(fold, Hf)
    blin = jnp.tile(b_lin, fold)[None, :]
    gate_t = jnp.tile(gate, fold)
    gc1 = (gate_t * c1)[None, :]
    gc0 = (gate_t * c0)[None, :]
    scal = jnp.stack([a, b])                          # SMEM scalars

    # ---- Row tile: >=2 tiles (v7x megacore), sublane-aligned, VMEM-capped.
    align = 16 if itemsize < 4 else 8
    tn = min(block_rows, max(align, -(-nf // 2)))     # at least 2 tiles if possible
    tn = -(-tn // align) * align
    row_bytes = 2 * Hf * itemsize + fold * 4          # streamed hs-in + out + s
    vmem_cap = (28 * 1024 * 1024) // (2 * row_bytes)  # 2x for double buffering
    tn = max(align, min(tn, (vmem_cap // align) * align))
    grid = (-(-nf // tn),)                            # ragged last block is masked

    out2d = pl.pallas_call(
        _sentiment_attention_kernel,
        out_shape=jax.ShapeDtypeStruct((nf, Hf), out_dtype),
        grid=grid,
        in_specs=[
            pl.BlockSpec(memory_space=pltpu.MemorySpace.SMEM),  # [a, b]
            pl.BlockSpec((tn, fold), lambda i: (i, 0)),         # sentiment (small)
            pl.BlockSpec((tn, Hf), lambda i: (i, 0)),           # hidden tile
            pl.BlockSpec((fold, Hf), lambda i: (0, 0)),         # w_lin mask (resident)
            pl.BlockSpec((1, Hf), lambda i: (0, 0)),            # b_lin (resident)
            pl.BlockSpec((1, Hf), lambda i: (0, 0)),            # gate*c1 (resident)
            pl.BlockSpec((1, Hf), lambda i: (0, 0)),            # gate*c0 (resident)
        ],
        out_specs=pl.BlockSpec((tn, Hf), lambda i: (i, 0)),
        compiler_params=pltpu.CompilerParams(
            dimension_semantics=("parallel",),
            vmem_limit_bytes=48 * 1024 * 1024,
        ),
        cost_estimate=pl.CostEstimate(
            flops=(16 + 2 * fold) * nf * Hf,
            transcendentals=2 * nf * Hf,
            bytes_accessed=2 * nf * Hf * itemsize + 4 * nf * fold
                           + 4 * (fold + 3) * Hf + 8,
        ),
    )(scal, s_k, hs_k, wmask, blin, gc1, gc0)

    return out2d.reshape(B, S, H)


if __name__ == "__main__":
    key = jax.random.PRNGKey(0)

    def make_params(k, H):
        k1, k2 = jax.random.split(k)
        return {
            "w_lin": jax.random.normal(k1, (H,), jnp.float32) * 0.5,
            "b_lin": jax.random.normal(k2, (H,), jnp.float32) * 0.1,
            "weight": jnp.ones((H,), jnp.float32),
            "a": jnp.float32(0.2),
            "b": jnp.float32(-0.1),
            "scale": jnp.float32(1.0),
        }

    def reference(hidden_states, sentiment_scores, params):
        # Pure-JAX mirror of the PyTorch forward (f32 math).
        hs = hidden_states.astype(jnp.float32)
        x = (sentiment_scores.astype(jnp.float32)[..., None] * params["w_lin"]
             + params["b_lin"])
        cub = jnp.sign(x) * jnp.abs(x) ** 3
        raw = jnp.exp(params["a"] * jnp.abs(x - cub) + params["b"] * jnp.abs(x + cub))
        w = params["scale"] * (raw - raw.min()) / (raw.max() - raw.min())
        return hs * params["weight"] * (w * jnp.tanh(x))

    # Case 1: small hidden (H=32) -> lane-dense folded path (fold=4), f32 I/O,
    # 4-tile grid.
    B, S, H = 2, 128, 32
    k1, k2, k3, key = jax.random.split(key, 4)
    hs = jax.random.normal(k1, (B, S, H), dtype=jnp.float32)
    ss = jax.random.normal(k2, (B, S), dtype=jnp.float32)
    p = make_params(k3, H)
    out = jax.block_until_ready(sentiment_attention_layer(hs, ss, p, block_rows=16))
    ref = reference(hs, ss, p)
    assert out.shape == (B, S, H) and out.dtype == hs.dtype
    assert jnp.allclose(out, ref, atol=2e-5, rtol=2e-5)

    # Case 2: lane-aligned hidden (H=128), native bf16 I/O (halved HBM bytes),
    # 2-tile grid, output stays bf16.
    B2, S2, H2 = 2, 16, 128
    k1, k2, k3, key = jax.random.split(key, 4)
    hs2 = jax.random.normal(k1, (B2, S2, H2), dtype=jnp.float32).astype(jnp.bfloat16)
    ss2 = jax.random.normal(k2, (B2, S2), dtype=jnp.float32)
    p2 = make_params(k3, H2)
    out2 = jax.block_until_ready(sentiment_attention_layer(hs2, ss2, p2))
    ref2 = reference(hs2, ss2, p2)
    assert out2.dtype == jnp.bfloat16
    assert jnp.allclose(out2.astype(jnp.float32), ref2, atol=2e-2, rtol=2e-2)

    # Case 3: ragged row count (24 rows, tn=16): no wrapper pad / tail slice,
    # Pallas masks the last block.
    B3, S3, H3 = 1, 24, 128
    k1, k2, k3, key = jax.random.split(key, 4)
    hs3 = jax.random.normal(k1, (B3, S3, H3), dtype=jnp.float32)
    ss3 = jax.random.normal(k2, (B3, S3), dtype=jnp.float32)
    p3 = make_params(k3, H3)
    out3 = jax.block_until_ready(sentiment_attention_layer(hs3, ss3, p3))
    ref3 = reference(hs3, ss3, p3)
    assert jnp.allclose(out3, ref3, atol=2e-5, rtol=2e-5)

    print("KERNEL_OK")
</pallas_src>

<mosaic_0001>
module attributes {stable_mosaic.version = 11 : i64} {
  func.func @_sentiment_attention_kernel(%arg0: i32, %arg1: memref<2xf32, #tpu.memory_space<smem>>, %arg2: memref<16x4xf32, #tpu.memory_space<vmem>>, %arg3: memref<16x128xf32, #tpu.memory_space<vmem>>, %arg4: memref<4x128xf32, #tpu.memory_space<vmem>>, %arg5: memref<1x128xf32, #tpu.memory_space<vmem>>, %arg6: memref<1x128xf32, #tpu.memory_space<vmem>>, %arg7: memref<1x128xf32, #tpu.memory_space<vmem>>, %arg8: memref<16x128xf32, #tpu.memory_space<vmem>>) attributes {dimension_semantics = [#tpu.dimension_semantics<parallel>], iteration_bounds = array<i64: 4>, scalar_prefetch = 0 : i64, scratch_operands = 0 : i64, tpu.core_type = #tpu.core_type<tc>, window_params = [{transform_indices = @transform_0, window_bounds = array<i64: 2>}, {transform_indices = @transform_1, window_bounds = array<i64: 16, 4>}, {transform_indices = @transform_2, window_bounds = array<i64: 16, 128>}, {pipeline_mode = #tpu.pipeline_mode<synchronous>, transform_indices = @transform_3, window_bounds = array<i64: 4, 128>}, {pipeline_mode = #tpu.pipeline_mode<synchronous>, transform_indices = @transform_4, window_bounds = array<i64: 1, 128>}, {pipeline_mode = #tpu.pipeline_mode<synchronous>, transform_indices = @transform_5, window_bounds = array<i64: 1, 128>}, {pipeline_mode = #tpu.pipeline_mode<synchronous>, transform_indices = @transform_6, window_bounds = array<i64: 1, 128>}, {transform_indices = @transform_7, window_bounds = array<i64: 16, 128>}]} {
    %c0 = arith.constant 0 : index
    %0 = memref.load %arg1[%c0] : memref<2xf32, #tpu.memory_space<smem>>
    %c1 = arith.constant 1 : index
    %1 = memref.load %arg1[%c1] : memref<2xf32, #tpu.memory_space<smem>>
    %c0_0 = arith.constant 0 : index
    %c0_1 = arith.constant 0 : index
    %2 = vector.load %arg2[%c0_0, %c0_1] : memref<16x4xf32, #tpu.memory_space<vmem>>, vector<16x4xf32>
    %3 = vector.extract_strided_slice %2 {offsets = [0, 0], sizes = [16, 1], strides = [1, 1]} : vector<16x4xf32> to vector<16x1xf32>
    %c0_2 = arith.constant 0 : index
    %c0_3 = arith.constant 0 : index
    %4 = vector.load %arg4[%c0_2, %c0_3] : memref<4x128xf32, #tpu.memory_space<vmem>>, vector<1x128xf32>
    %5 = vector.broadcast %3 : vector<16x1xf32> to vector<16x128xf32>
    %6 = vector.broadcast %4 : vector<1x128xf32> to vector<16x128xf32>
    %7 = arith.mulf %5, %6 : vector<16x128xf32>
    %8 = vector.extract_strided_slice %2 {offsets = [0, 1], sizes = [16, 1], strides = [1, 1]} : vector<16x4xf32> to vector<16x1xf32>
    %c1_4 = arith.constant 1 : index
    %c0_5 = arith.constant 0 : index
    %9 = vector.load %arg4[%c1_4, %c0_5] : memref<4x128xf32, #tpu.memory_space<vmem>>, vector<1x128xf32>
    %10 = vector.broadcast %8 : vector<16x1xf32> to vector<16x128xf32>
    %11 = vector.broadcast %9 : vector<1x128xf32> to vector<16x128xf32>
    %12 = arith.mulf %10, %11 : vector<16x128xf32>
    %13 = arith.addf %7, %12 : vector<16x128xf32>
    %14 = vector.extract_strided_slice %2 {offsets = [0, 2], sizes = [16, 1], strides = [1, 1]} : vector<16x4xf32> to vector<16x1xf32>
    %c2 = arith.constant 2 : index
    %c0_6 = arith.constant 0 : index
    %15 = vector.load %arg4[%c2, %c0_6] : memref<4x128xf32, #tpu.memory_space<vmem>>, vector<1x128xf32>
    %16 = vector.broadcast %14 : vector<16x1xf32> to vector<16x128xf32>
    %17 = vector.broadcast %15 : vector<1x128xf32> to vector<16x128xf32>
    %18 = arith.mulf %16, %17 : vector<16x128xf32>
    %19 = arith.addf %13, %18 : vector<16x128xf32>
    %20 = vector.extract_strided_slice %2 {offsets = [0, 3], sizes = [16, 1], strides = [1, 1]} : vector<16x4xf32> to vector<16x1xf32>
    %c3 = arith.constant 3 : index
    %c0_7 = arith.constant 0 : index
    %21 = vector.load %arg4[%c3, %c0_7] : memref<4x128xf32, #tpu.memory_space<vmem>>, vector<1x128xf32>
    %22 = vector.broadcast %20 : vector<16x1xf32> to vector<16x128xf32>
    %23 = vector.broadcast %21 : vector<1x128xf32> to vector<16x128xf32>
    %24 = arith.mulf %22, %23 : vector<16x128xf32>
    %25 = arith.addf %19, %24 : vector<16x128xf32>
    %c0_8 = arith.constant 0 : index
    %c0_9 = arith.constant 0 : index
    %26 = vector.load %arg5[%c0_8, %c0_9] : memref<1x128xf32, #tpu.memory_space<vmem>>, vector<1x128xf32>
    %27 = vector.broadcast %26 : vector<1x128xf32> to vector<16x128xf32>
    %28 = arith.addf %25, %27 : vector<16x128xf32>
    %29 = arith.mulf %28, %28 : vector<16x128xf32>
    %30 = arith.mulf %29, %28 : vector<16x128xf32>
    %31 = arith.subf %28, %30 : vector<16x128xf32>
    %32 = math.absf %31 : vector<16x128xf32>
    %33 = vector.broadcast %0 : f32 to vector<16x128xf32>
    %34 = arith.mulf %33, %32 : vector<16x128xf32>
    %35 = arith.addf %28, %30 : vector<16x128xf32>
    %36 = math.absf %35 : vector<16x128xf32>
    %37 = vector.broadcast %1 : f32 to vector<16x128xf32>
    %38 = arith.mulf %37, %36 : vector<16x128xf32>
    %39 = arith.addf %34, %38 : vector<16x128xf32>
    %40 = math.exp %39 : vector<16x128xf32>
    %c0_10 = arith.constant 0 : index
    %c0_11 = arith.constant 0 : index
    %41 = vector.load %arg6[%c0_10, %c0_11] : memref<1x128xf32, #tpu.memory_space<vmem>>, vector<1x128xf32>
    %42 = vector.broadcast %41 : vector<1x128xf32> to vector<16x128xf32>
    %43 = arith.mulf %42, %40 : vector<16x128xf32>
    %c0_12 = arith.constant 0 : index
    %c0_13 = arith.constant 0 : index
    %44 = vector.load %arg7[%c0_12, %c0_13] : memref<1x128xf32, #tpu.memory_space<vmem>>, vector<1x128xf32>
    %45 = vector.broadcast %44 : vector<1x128xf32> to vector<16x128xf32>
    %46 = arith.addf %43, %45 : vector<16x128xf32>
    %47 = math.tanh %28 : vector<16x128xf32>
    %48 = arith.mulf %46, %47 : vector<16x128xf32>
    %c0_14 = arith.constant 0 : index
    %c0_15 = arith.constant 0 : index
    %49 = vector.load %arg3[%c0_14, %c0_15] : memref<16x128xf32, #tpu.memory_space<vmem>>, vector<16x128xf32>
    %50 = arith.mulf %49, %48 : vector<16x128xf32>
    %c0_16 = arith.constant 0 : index
    %c0_17 = arith.constant 0 : index
    %51 = vector.load %arg8[%c0_16, %c0_17] : memref<16x128xf32, #tpu.memory_space<vmem>>, vector<16x128xf32>
    tpu.vector_store %arg8[%c0_16, %c0_17], %50 {strides = array<i32>} : memref<16x128xf32, #tpu.memory_space<vmem>>, vector<16x128xf32>,
    return
  }
  func.func @transform_0(%arg0: i32) -> i32 {
    %c0_i32 = arith.constant 0 : i32
    %c0_i32_0 = arith.constant 0 : i32
    return %c0_i32 : i32
  }
  func.func @transform_1(%arg0: i32) -> (i32, i32) {
    %c0_i32 = arith.constant 0 : i32
    %c0_i32_0 = arith.constant 0 : i32
    return %arg0, %c0_i32 : i32, i32
  }
  func.func @transform_2(%arg0: i32) -> (i32, i32) {
    %c0_i32 = arith.constant 0 : i32
    %c0_i32_0 = arith.constant 0 : i32
    return %arg0, %c0_i32 : i32, i32
  }
  func.func @transform_3(%arg0: i32) -> (i32, i32) {
    %c0_i32 = arith.constant 0 : i32
    %c0_i32_0 = arith.constant 0 : i32
    %c0_i32_1 = arith.constant 0 : i32
    return %c0_i32, %c0_i32_0 : i32, i32
  }
  func.func @transform_4(%arg0: i32) -> (i32, i32) {
    %c0_i32 = arith.constant 0 : i32
    %c0_i32_0 = arith.constant 0 : i32
    %c0_i32_1 = arith.constant 0 : i32
    return %c0_i32, %c0_i32_0 : i32, i32
  }
  func.func @transform_5(%arg0: i32) -> (i32, i32) {
    %c0_i32 = arith.constant 0 : i32
    %c0_i32_0 = arith.constant 0 : i32
    %c0_i32_1 = arith.constant 0 : i32
    return %c0_i32, %c0_i32_0 : i32, i32
  }
  func.func @transform_6(%arg0: i32) -> (i32, i32) {
    %c0_i32 = arith.constant 0 : i32
    %c0_i32_0 = arith.constant 0 : i32
    %c0_i32_1 = arith.constant 0 : i32
    return %c0_i32, %c0_i32_0 : i32, i32
  }
  func.func @transform_7(%arg0: i32) -> (i32, i32) {
    %c0_i32 = arith.constant 0 : i32
    %c0_i32_0 = arith.constant 0 : i32
    return %arg0, %c0_i32 : i32, i32
  }
}

</mosaic_0001>

<llo_original>
// kernel: sentiment_attention_layer.1
$region0: #{sentiment_attention_layer.1}
  #allocation0 [shape = 'u32[]', space=smem, size = 0x4, offset = 0x4, fixed_abs, tag = 'smem constant byte address 0x4 - core index']
  #allocation1 [shape = 'u32[144,128]{1,0:T(1,128)}', space=vmem, size = 0x12000, scoped, tag = 'internal scratch']
  %s0 = inlined_call_operand.vmem [shape: f32[2], index: 0, kind: input, shape index: {}]
  %s1 = inlined_call_operand.vmem [shape: f32[64,4], index: 1, kind: input, shape index: {}]
  %s2 = inlined_call_operand.vmem [shape: f32[64,128], index: 2, kind: input, shape index: {}]
  %s3 = inlined_call_operand.vmem [shape: f32[4,128], index: 3, kind: input, shape index: {}]
  %s4 = inlined_call_operand.vmem [shape: f32[1,128], index: 4, kind: input, shape index: {}]
  %s5 = inlined_call_operand.vmem [shape: f32[1,128], index: 5, kind: input, shape index: {}]
  %s6 = inlined_call_operand.vmem [shape: f32[1,128], index: 6, kind: input, shape index: {}]
  %s7 = inlined_call_operand.vmem [shape: f32[64,128], index: 7, kind: output, shape index: {}]
  %s8 = sld [smem:[#allocation0]]
  $region65: #{sentiment_attention_layer.1} parent=0
    _
  %s10 = ssub.s32 1, %s8
  %s11 = scalar_select 0, %s10, %s8
  $region1: #{sentiment_attention_layer.1} parent=0
    #allocation2 [shape = 'u8[512]{0}', space=smem, size = 0x200, scoped, tag = 'input window, operand 0, single buffered']
    #allocation3 [shape = 's32[2]{0}', space=sflag, size = 0x8, scoped, tag = 'scoped memory for sentiment_attention_layer.1']
    %12 = vsyncpa [#allocation3], 0
    loop: start=0, step=1, limit=6
    $region2: #{sentiment_attention_layer.1} parent=1 // loop_pre_header
      _
    $region3: #{sentiment_attention_layer.1} parent=1 // loop_header
      %s14 = sphi 0, %s18
      %p15 = scmp.ge.s32.totalorder %s14, 6
      %s22 = sphi 0, %s22
      %s24 = sphi 0, %s22
      %s25 = sphi 0, %s24
      %s39 = sphi 0, %s25
      %s45 = sphi 0, %s47
      %s48 = sphi 0, %s45
      %s49 = sphi 0, %s48
      %s65 = sphi 0, %s49
      %s71 = sphi 0, %s73
      %s74 = sphi 0, %s71
      %s75 = sphi 0, %s74
      %s91 = sphi 0, %s75
      %s95 = sphi 0, %s95
      %s97 = sphi 0, %s95
      %s98 = sphi 0, %s97
      %s112 = sphi 0, %s98
      %s116 = sphi 0, %s116
      %s118 = sphi 0, %s116
      %s119 = sphi 0, %s118
      %s133 = sphi 0, %s119
      %s137 = sphi 0, %s137
      %s139 = sphi 0, %s137
      %s140 = sphi 0, %s139
      %s154 = sphi 0, %s140
      %s158 = sphi 0, %s158
      %s160 = sphi 0, %s158
      %s161 = sphi 0, %s160
      %s175 = sphi 0, %s161
      %s181 = sphi 0, %s183
      %s184 = sphi 0, %s181
      %s185 = sphi 0, %s184
      %s201 = sphi 0, %s185
    $region4: #{sentiment_attention_layer.1} parent=1 // loop_header_branch
      %17 = sbr.rel (%p15) target = $region8
    $region5: #{sentiment_attention_layer.1} parent=1 // loop_body
      %s19 = ssub.s32 %s14, 1
      %s20 = ssub.s32 %s14, 2
      %s21 = sadd.s32 %s14, 1
      %s23 = sadd.s32 %s22, 1
      %p26 = scmp.eq.s32.totalorder %s14, 3
      %p27 = scmp.ne.s32.totalorder %s22, %s24
      %p28 = scmp.eq.s32.totalorder %s14, 0
      %p29 = por %p27, %p28
      %p30 = scmp.ne.s32.totalorder %s22, %s24
      %p31 = scmp.eq.s32.totalorder %s19, 3
      %p32 = por %p30, %p31
      %p33 = scmp.ne.s32.totalorder %s24, %s25
      %p34 = scmp.eq.s32.totalorder %s19, 0
      %p35 = por %p33, %p34
      %p36 = scmp.ne.s32.totalorder %s24, %s25
      %p37 = scmp.eq.s32.totalorder %s20, 3
      %p38 = por %p36, %p37
      %p40 = scmp.ne.s32.totalorder %s25, %s39
      %p41 = scmp.eq.s32.totalorder %s20, 0
      %p42 = por %p40, %p41
      %s43 = ssub.s32 %s14, %s21
      %p44 = scmp.eq.s32.totalorder %s43, 0
      %s46 = sadd.s32 %s45, 1
      %s47 = scalar_select %p44, %s45, %s46
      %p50 = pneg %p44
      %p51 = scmp.eq.s32.totalorder %s14, 3
      %p52 = por %p50, %p51
      %p53 = scmp.ne.s32.totalorder %s45, %s48
      %p54 = scmp.eq.s32.totalorder %s14, 0
      %p55 = por %p53, %p54
      %p56 = scmp.ne.s32.totalorder %s45, %s48
      %p57 = scmp.eq.s32.totalorder %s19, 3
      %p58 = por %p56, %p57
      %p59 = scmp.ne.s32.totalorder %s48, %s49
      %p60 = scmp.eq.s32.totalorder %s19, 0
      %p61 = por %p59, %p60
      %p62 = scmp.ne.s32.totalorder %s48, %s49
      %p63 = scmp.eq.s32.totalorder %s20, 3
      %p64 = por %p62, %p63
      %p66 = scmp.ne.s32.totalorder %s49, %s65
      %p67 = scmp.eq.s32.totalorder %s20, 0
      %p68 = por %p66, %p67
      %s69 = ssub.s32 %s14, %s21
      %p70 = scmp.eq.s32.totalorder %s69, 0
      %s72 = sadd.s32 %s71, 1
      %s73 = scalar_select %p70, %s71, %s72
      %p76 = pneg %p70
      %p77 = scmp.eq.s32.totalorder %s14, 3
      %p78 = por %p76, %p77
      %p79 = scmp.ne.s32.totalorder %s71, %s74
      %p80 = scmp.eq.s32.totalorder %s14, 0
      %p81 = por %p79, %p80
      %p82 = scmp.ne.s32.totalorder %s71, %s74
      %p83 = scmp.eq.s32.totalorder %s19, 3
      %p84 = por %p82, %p83
      %p85 = scmp.ne.s32.totalorder %s74, %s75
      %p86 = scmp.eq.s32.totalorder %s19, 0
      %p87 = por %p85, %p86
      %p88 = scmp.ne.s32.totalorder %s74, %s75
      %p89 = scmp.eq.s32.totalorder %s20, 3
      %p90 = por %p88, %p89
      %p92 = scmp.ne.s32.totalorder %s75, %s91
      %p93 = scmp.eq.s32.totalorder %s20, 0
      %p94 = por %p92, %p93
      %s96 = sadd.s32 %s95, 1
      %p99 = scmp.eq.s32.totalorder %s14, 3
      %p100 = scmp.ne.s32.totalorder %s95, %s97
      %p101 = scmp.eq.s32.totalorder %s14, 0
      %p102 = por %p100, %p101
      %p103 = scmp.ne.s32.totalorder %s95, %s97
      %p104 = scmp.eq.s32.totalorder %s19, 3
      %p105 = por %p103, %p104
      %p106 = scmp.ne.s32.totalorder %s97, %s98
      %p107 = scmp.eq.s32.totalorder %s19, 0
      %p108 = por %p106, %p107
      %p109 = scmp.ne.s32.totalorder %s97, %s98
      %p110 = scmp.eq.s32.totalorder %s20, 3
      %p111 = por %p109, %p110
      %p113 = scmp.ne.s32.totalorder %s98, %s112
      %p114 = scmp.eq.s32.totalorder %s20, 0
      %p115 = por %p113, %p114
      %s117 = sadd.s32 %s116, 1
      %p120 = scmp.eq.s32.totalorder %s14, 3
      %p121 = scmp.ne.s32.totalorder %s116, %s118
      %p122 = scmp.eq.s32.totalorder %s14, 0
      %p123 = por %p121, %p122
      %p124 = scmp.ne.s32.totalorder %s116, %s118
      %p125 = scmp.eq.s32.totalorder %s19, 3
      %p126 = por %p124, %p125
      %p127 = scmp.ne.s32.totalorder %s118, %s119
      %p128 = scmp.eq.s32.totalorder %s19, 0
      %p129 = por %p127, %p128
      %p130 = scmp.ne.s32.totalorder %s118, %s119
      %p131 = scmp.eq.s32.totalorder %s20, 3
      %p132 = por %p130, %p131
      %p134 = scmp.ne.s32.totalorder %s119, %s133
      %p135 = scmp.eq.s32.totalorder %s20, 0
      %p136 = por %p134, %p135
      %s138 = sadd.s32 %s137, 1
      %p141 = scmp.eq.s32.totalorder %s14, 3
      %p142 = scmp.ne.s32.totalorder %s137, %s139
      %p143 = scmp.eq.s32.totalorder %s14, 0
      %p144 = por %p142, %p143
      %p145 = scmp.ne.s32.totalorder %s137, %s139
      %p146 = scmp.eq.s32.totalorder %s19, 3
      %p147 = por %p145, %p146
      %p148 = scmp.ne.s32.totalorder %s139, %s140
      %p149 = scmp.eq.s32.totalorder %s19, 0
      %p150 = por %p148, %p149
      %p151 = scmp.ne.s32.totalorder %s139, %s140
      %p152 = scmp.eq.s32.totalorder %s20, 3
      %p153 = por %p151, %p152
      %p155 = scmp.ne.s32.totalorder %s140, %s154
      %p156 = scmp.eq.s32.totalorder %s20, 0
      %p157 = por %p155, %p156
      %s159 = sadd.s32 %s158, 1
      %p162 = scmp.eq.s32.totalorder %s14, 3
      %p163 = scmp.ne.s32.totalorder %s158, %s160
      %p164 = scmp.eq.s32.totalorder %s14, 0
      %p165 = por %p163, %p164
      %p166 = scmp.ne.s32.totalorder %s158, %s160
      %p167 = scmp.eq.s32.totalorder %s19, 3
      %p168 = por %p166, %p167
      %p169 = scmp.ne.s32.totalorder %s160, %s161
      %p170 = scmp.eq.s32.totalorder %s19, 0
      %p171 = por %p169, %p170
      %p172 = scmp.ne.s32.totalorder %s160, %s161
      %p173 = scmp.eq.s32.totalorder %s20, 3
      %p174 = por %p172, %p173
      %p176 = scmp.ne.s32.totalorder %s161, %s175
      %p177 = scmp.eq.s32.totalorder %s20, 0
      %p178 = por %p176, %p177
      %s179 = ssub.s32 %s14, %s21
      %p180 = scmp.eq.s32.totalorder %s179, 0
      %s182 = sadd.s32 %s181, 1
      %s183 = scalar_select %p180, %s181, %s182
      %p186 = pneg %p180
      %p187 = scmp.eq.s32.totalorder %s14, 3
      %p188 = por %p186, %p187
      %p189 = scmp.ne.s32.totalorder %s181, %s184
      %p190 = scmp.eq.s32.totalorder %s14, 0
      %p191 = por %p189, %p190
      %p192 = scmp.ne.s32.totalorder %s181, %s184
      %p193 = scmp.eq.s32.totalorder %s19, 3
      %p194 = por %p192, %p193
      %p195 = scmp.ne.s32.totalorder %s184, %s185
      %p196 = scmp.eq.s32.totalorder %s19, 0
      %p197 = por %p195, %p196
      %p198 = scmp.ne.s32.totalorder %s184, %s185
      %p199 = scmp.eq.s32.totalorder %s20, 3
      %p200 = por %p198, %p199
      %p202 = scmp.ne.s32.totalorder %s185, %s201
      %p203 = scmp.eq.s32.totalorder %s20, 0
      %p204 = por %p202, %p203
      %p205 = scmp.le.s32.totalorder 1, %s14
      %p206 = scmp.lt.s32.totalorder %s14, 5
      %p207 = pnand %p205, %p206
      %p208 = pneg %p207
      // Predicated region
      $region9: #{sentiment_attention_layer.1} parent=5 // pred_check
        _
      $region10: #{sentiment_attention_layer.1} parent=5 // pred_check_branch
        %210 = sbr.rel (%p207) target = $region12
      $region11: #{sentiment_attention_layer.1} parent=5 // pred_region
        %s211 = ssub.s32 %s14, 1
        // Predicated region
        $region13: #{sentiment_attention_layer.1} parent=11 // pred_check
          %p212 = pneg %p35
        $region14: #{sentiment_attention_layer.1} parent=11 // pred_check_branch
          %214 = sbr.rel (%p212) target = $region16
        $region15: #{sentiment_attention_layer.1} parent=11 // pred_region
          %s216 = ssub.s32 16, 16
          %217 = vsyncadd [#allocation3], %s216
          %s219 = sshll.u32 %s0, 4
          %s220 = int_to_ptr.vmem [resolvable:$true] %s219
          %222 = dma.vmem_to_smem %s220, 16, [#allocation2], [#allocation3]
        $region16: #{sentiment_attention_layer.1} parent=11 // pred_fallthru
          _
        // Predicated region
        $region17: #{sentiment_attention_layer.1} parent=11 // pred_check
          %p223 = pneg %p108
        $region18: #{sentiment_attention_layer.1} parent=11 // pred_check_branch
          %225 = sbr.rel (%p223) target = $region20
        $region19: #{sentiment_attention_layer.1} parent=11 // pred_region
          _
        $region20: #{sentiment_attention_layer.1} parent=11 // pred_fallthru
          _
        // Predicated region
        $region21: #{sentiment_attention_layer.1} parent=11 // pred_check
          %p226 = pneg %p129
        $region22: #{sentiment_attention_layer.1} parent=11 // pred_check_branch
          %228 = sbr.rel (%p226) target = $region24
        $region23: #{sentiment_attention_layer.1} parent=11 // pred_region
          _
        $region24: #{sentiment_attention_layer.1} parent=11 // pred_fallthru
          _
        // Predicated region
        $region25: #{sentiment_attention_layer.1} parent=11 // pred_check
          %p229 = pneg %p150
        $region26: #{sentiment_attention_layer.1} parent=11 // pred_check_branch
          %231 = sbr.rel (%p229) target = $region28
        $region27: #{sentiment_attention_layer.1} parent=11 // pred_region
          _
        $region28: #{sentiment_attention_layer.1} parent=11 // pred_fallthru
          _
        // Predicated region
        $region29: #{sentiment_attention_layer.1} parent=11 // pred_check
          %p232 = pneg %p171
        $region30: #{sentiment_attention_layer.1} parent=11 // pred_check_branch
          %234 = sbr.rel (%p232) target = $region32
        $region31: #{sentiment_attention_layer.1} parent=11 // pred_region
          _
        $region32: #{sentiment_attention_layer.1} parent=11 // pred_fallthru
          _
      $region12: #{sentiment_attention_layer.1} parent=5 // pred_fallthru
        _
      %p235 = scmp.lt.s32.totalorder %s14, 4
      // Predicated region
      $region33: #{sentiment_attention_layer.1} parent=5 // pred_check
        %p236 = pneg %p235
      $region34: #{sentiment_attention_layer.1} parent=5 // pred_check_branch
        %238 = sbr.rel (%p236) target = $region36
      $region35: #{sentiment_attention_layer.1} parent=5 // pred_region
        // Predicated region
        $region37: #{sentiment_attention_layer.1} parent=35 // pred_check
          %p239 = pneg %p55
        $region38: #{sentiment_attention_layer.1} parent=35 // pred_check_branch
          %241 = sbr.rel (%p239) target = $region40
        $region39: #{sentiment_attention_layer.1} parent=35 // pred_region
          %s242 = smul.u32 2, %s14
          %p243 = scmp.lt.s32.totalorder %s242, 7
          %s244 = scalar_select %p243, %s242, 7
          %s245 = smul.addr %s244, 8
          %s246 = scalar_lea.vmem %s1, %s245
          %s247 = smul.u32 2, %s14
        $region40: #{sentiment_attention_layer.1} parent=35 // pred_fallthru
          _
        // Predicated region
        $region41: #{sentiment_attention_layer.1} parent=35 // pred_check
          %p248 = pneg %p81
        $region42: #{sentiment_attention_layer.1} parent=35 // pred_check_branch
          %250 = sbr.rel (%p248) target = $region44
        $region43: #{sentiment_attention_layer.1} parent=35 // pred_region
          %s251 = smul.u32 2, %s14
          %p252 = scmp.lt.s32.totalorder %s251, 7
          %s253 = scalar_select %p252, %s251, 7
          %s254 = smul.addr %s253, 8
          %s255 = scalar_lea.vmem %s2, %s254
          %s256 = smul.u32 2, %s14
        $region44: #{sentiment_attention_layer.1} parent=35 // pred_fallthru
          _
      $region36: #{sentiment_attention_layer.1} parent=5 // pred_fallthru
        _
      %p257 = scmp.le.s32.totalorder 1, %s14
      %p258 = scmp.lt.s32.totalorder %s14, 5
      %p259 = pnand %p257, %p258
      %p260 = pneg %p259
      // Predicated region
      $region45: #{sentiment_attention_layer.1} parent=5 // pred_check
        _
      $region46: #{sentiment_attention_layer.1} parent=5 // pred_check_branch
        %262 = sbr.rel (%p259) target = $region48
      $region47: #{sentiment_attention_layer.1} parent=5 // pred_region
        %s263 = ssub.s32 %s14, 1
        // Predicated region
        $region49: #{sentiment_attention_layer.1} parent=47 // pred_check
          %p264 = pneg %p35
        $region50: #{sentiment_attention_layer.1} parent=47 // pred_check_branch
          %266 = sbr.rel (%p264) target = $region52
        $region51: #{sentiment_attention_layer.1} parent=47 // pred_region
          %267 = dma.done [#allocation3], 16
        $region52: #{sentiment_attention_layer.1} parent=47 // pred_fallthru
          _
        %268 = sfence
        %p269 = pneg %p35
        %p270 = pneg %p32
        %s271 = smul.u32 2, %s19
        %p272 = scmp.lt.s32.totalorder %s271, 7
        %s273 = scalar_select %p272, %s271, 7
        %s274 = smul.addr %s273, 8
        %s275 = scalar_lea.vmem %s1, %s274
        %p276 = pneg %p61
        %p277 = pneg %p58
        %s278 = smul.u32 2, %s19
        %p279 = scmp.lt.s32.totalorder %s278, 7
        %s280 = scalar_select %p279, %s278, 7
        %s281 = smul.addr %s280, 8
        %s282 = scalar_lea.vmem %s2, %s281
        %p283 = pneg %p87
        %p284 = pneg %p84
        %p285 = pneg %p108
        %p286 = pneg %p105
        %p287 = pneg %p129
        %p288 = pneg %p126
        %p289 = pneg %p150
        %p290 = pneg %p147
        %p291 = pneg %p171
        %p292 = pneg %p168
        %p293 = pneg %p197
        %p294 = pneg %p194
        %s295 = smul.u32 2, %s19
        %p296 = scmp.lt.s32.totalorder %s295, 7
        %s297 = scalar_select %p296, %s295, 7
        %s298 = smul.addr %s297, 8
        %s299 = scalar_lea.vmem %s7, %s298
        %s300 = smul.u32 2, %s19
        %p301 = scmp.lt.s32.totalorder %s300, 7
        %s302 = scalar_select %p301, %s300, 7
        %s303 = smul.addr %s302, 8
        %s304 = scalar_lea.vmem %s1, %s303
        %s305 = smul.u32 2, %s19
        %s306 = smul.u32 2, %s19
        %p307 = scmp.lt.s32.totalorder %s306, 7
        %s308 = scalar_select %p307, %s306, 7
        %s309 = smul.addr %s308, 8
        %s310 = scalar_lea.vmem %s2, %s309
        %s311 = smul.u32 2, %s19
        %s312 = smul.u32 2, %s19
        %p313 = scmp.lt.s32.totalorder %s312, 7
        %s314 = scalar_select %p313, %s312, 7
        %s315 = smul.addr %s314, 8
        %s316 = scalar_lea.vmem %s7, %s315
        %s317 = smul.u32 2, %s19
        %s318 = sld [smem:[#allocation2]]
        %s319 = sld [smem:[#allocation2 + $0x1]]
        %v320 = vld [vmem:[%s304] sm:$0xff]
        %v321 = vld [vmem:[%s304 + $0x8] sm:$0xff]
        %v322 = vld [vmem:[%s3] sm:$0x1]
        %324 = vset.pattern.permute.xlu0 0
        %325 = vperm.xlu0 %324, %v320
        %v326 = vpop.permute.xlu0 %325
        %329 = vset.pattern.permute.xlu0 0
        %330 = vperm.xlu0 %329, %v321
        %v331 = vpop.permute.xlu0 %330
        %v333 = vlaneseq
        %v334 = vshrl.u32 %v333, 7
        %v335 = vsub.s32 0, %v334
        %v336 = vrot.slane %v322, %v335
        %v337 = vmul.f32 %v326, %v336
        %v338 = vmul.f32 %v331, %v336
        %v339 = vld [vmem:[%s3 + $0x1] sm:$0x1]
        %340 = vset.pattern.permute.xlu0 1
        %341 = vperm.xlu0 %340, %v320
        %v342 = vpop.permute.xlu0 %341
        %344 = vset.pattern.permute.xlu0 1
        %345 = vperm.xlu0 %344, %v321
        %v346 = vpop.permute.xlu0 %345
        %v348 = vlaneseq
        %v349 = vshrl.u32 %v348, 7
        %v350 = vsub.s32 0, %v349
        %v351 = vrot.slane %v339, %v350
        %v352 = vmul.f32 %v342, %v351
        %v353 = vmul.f32 %v346, %v351
        %v354 = vadd.f32 %v337, %v352
        %v355 = vadd.f32 %v338, %v353
        %v356 = vld [vmem:[%s3 + $0x2] sm:$0x1]
        %357 = vset.pattern.permute.xlu0 2
        %358 = vperm.xlu0 %357, %v320
        %v359 = vpop.permute.xlu0 %358
        %361 = vset.pattern.permute.xlu0 2
        %362 = vperm.xlu0 %361, %v321
        %v363 = vpop.permute.xlu0 %362
        %v365 = vlaneseq
        %v366 = vshrl.u32 %v365, 7
        %v367 = vsub.s32 0, %v366
        %v368 = vrot.slane %v356, %v367
        %v369 = vmul.f32 %v359, %v368
        %v370 = vmul.f32 %v363, %v368
        %v371 = vadd.f32 %v354, %v369
        %v372 = vadd.f32 %v355, %v370
        %v373 = vld [vmem:[%s3 + $0x3] sm:$0x1]
        %374 = vset.pattern.permute.xlu0 3
        %375 = vperm.xlu0 %374, %v320
        %v376 = vpop.permute.xlu0 %375
        %378 = vset.pattern.permute.xlu0 3
        %379 = vperm.xlu0 %378, %v321
        %v380 = vpop.permute.xlu0 %379
        %v382 = vlaneseq
        %v383 = vshrl.u32 %v382, 7
        %v384 = vsub.s32 0, %v383
        %v385 = vrot.slane %v373, %v384
        %v386 = vmul.f32 %v376, %v385
        %v387 = vmul.f32 %v380, %v385
        %v388 = vadd.f32 %v371, %v386
        %v389 = vadd.f32 %v372, %v387
        %v390 = vld [vmem:[%s4] sm:$0x1]
        %v392 = vlaneseq
        %v393 = vshrl.u32 %v392, 7
        %v394 = vsub.s32 0, %v393
        %v395 = vrot.slane %v390, %v394
        %v397 = vadd.f32 %v388, %v395
        %v398 = vadd.f32 %v389, %v395
        %v399 = vmul.f32 %v397, %v397
        %v400 = vmul.f32 %v398, %v398
        %v401 = vmul.f32 %v399, %v397
        %v402 = vmul.f32 %v400, %v398
        %v403 = vsub.f32 %v397, %v401
        %v404 = vsub.f32 %v398, %v402
        %v405 = vand.u32 2147483647, %v403
        %v406 = vand.u32 2147483647, %v404
        %v407 = vstv %s318
        %v408 = vmul.f32 %v407, %v405
        %v409 = vmul.f32 %v407, %v406
        %v410 = vadd.f32 %v397, %v401
        %v411 = vadd.f32 %v398, %v402
        %v412 = vand.u32 2147483647, %v410
        %v413 = vand.u32 2147483647, %v411
        %v414 = vstv %s319
        %v415 = vmul.f32 %v414, %v412
        %v416 = vmul.f32 %v414, %v413
        %v417 = vadd.f32 %v408, %v415
        %v418 = vadd.f32 %v409, %v416
        %v419 = vmul.f32 %v417, 1.442695
        %v420 = vpow.pop %v419
        %v421 = vmul.f32 %v418, 1.442695
        %v422 = vpow.pop %v421
        %v423 = vld [vmem:[%s5] sm:$0x1]
        %v425 = vlaneseq
        %v426 = vshrl.u32 %v425, 7
        %v427 = vsub.s32 0, %v426
        %v428 = vrot.slane %v423, %v427
        %v430 = vmul.f32 %v428, %v420
        %v431 = vmul.f32 %v428, %v422
        %v432 = vld [vmem:[%s6] sm:$0x1]
        %v434 = vlaneseq
        %v435 = vshrl.u32 %v434, 7
        %v436 = vsub.s32 0, %v435
        %v437 = vrot.slane %v432, %v436
        %v439 = vadd.f32 %v430, %v437
        %v440 = vadd.f32 %v431, %v437
        %v441 = vtanh.pop %v397
        %v442 = vtanh.pop %v398
        %v443 = vmul.f32 %v439, %v441
        %v444 = vmul.f32 %v440, %v442
        %v445 = vld [vmem:[%s310] sm:$0xff]
        %v446 = vld [vmem:[%s310 + $0x8] sm:$0xff]
        %v447 = vmul.f32 %v445, %v443
        %v448 = vmul.f32 %v446, %v444
        %449 = vst [vmem:[%s316] sm:$0xff] %v447
        %450 = vst [vmem:[%s316 + $0x8] sm:$0xff] %v448
        %s451 = smul.u32 2, %s19
        %p452 = scmp.lt.s32.totalorder %s451, 7
        %s453 = scalar_select %p452, %s451, 7
        %s454 = smul.addr %s453, 8
        %s455 = scalar_lea.vmem %s7, %s454
        // Predicated region
        $region53: #{sentiment_attention_layer.1} parent=47 // pred_check
          %p456 = pneg %p194
        $region54: #{sentiment_attention_layer.1} parent=47 // pred_check_branch
          %458 = sbr.rel (%p456) target = $region56
        $region55: #{sentiment_attention_layer.1} parent=47 // pred_region
          %s459 = smul.u32 2, %s19
        $region56: #{sentiment_attention_layer.1} parent=47 // pred_fallthru
          _
      $region48: #{sentiment_attention_layer.1} parent=5 // pred_fallthru
        _
      %p460 = scmp.le.s32.totalorder 2, %s14
      // Predicated region
      $region57: #{sentiment_attention_layer.1} parent=5 // pred_check
        %p461 = pneg %p460
      $region58: #{sentiment_attention_layer.1} parent=5 // pred_check_branch
        %463 = sbr.rel (%p461) target = $region60
      $region59: #{sentiment_attention_layer.1} parent=5 // pred_region
        %s464 = ssub.s32 %s14, 2
        // Predicated region
        $region61: #{sentiment_attention_layer.1} parent=59 // pred_check
          %p465 = pneg %p200
        $region62: #{sentiment_attention_layer.1} parent=59 // pred_check_branch
          %467 = sbr.rel (%p465) target = $region64
        $region63: #{sentiment_attention_layer.1} parent=59 // pred_region
          %s468 = smul.u32 2, %s20
          %p469 = scmp.lt.s32.totalorder %s468, 7
          %s470 = scalar_select %p469, %s468, 7
          %s471 = smul.addr %s470, 8
          %s472 = scalar_lea.vmem %s7, %s471
        $region64: #{sentiment_attention_layer.1} parent=59 // pred_fallthru
          _
      $region60: #{sentiment_attention_layer.1} parent=5 // pred_fallthru
        _
    $region6: #{sentiment_attention_layer.1} parent=1 // loop_footer
      %s18 = sadd.s32 1, %s14
    $region7: #{sentiment_attention_layer.1} parent=1 // loop_footer_branch
      %13 = sbr.rel target = $region3
    $region8: #{sentiment_attention_layer.1} parent=1 // loop_exit
      _
    %473 = vsyncpa [#allocation3], 1
    %s474 = scalar_lea.sflag [#allocation3], 1
    %475 = vsyncpa %s474, 1

</llo_original>
